<compile_context>
chip_gen: v6e
topology: v6e:2x2x1
jax: 0.10.0
libtpu: 0.0.40
codegen_flags: <defaults>
</compile_context>

<pallas_src>
import functools

import jax
import jax.numpy as jnp
from jax.experimental import pallas as pl
from jax.experimental.pallas import tpu as pltpu

HERO_COUNT = 121        # const.HERO_COUNT (Dota 2 hero count in luafun)
HERO_COUNT_PAD = 128    # contraction dim zero-padded to a full lane width
LANE = 128
SUBLANE = 8

# Conservative VMEM budget for the double-buffered OUTPUT tile. 8 MiB leaves ample
# headroom on every generation (v5e/v6e: 128 MiB physical, v7x: 64 MiB / 32 MiB scoped).
_OUT_TILE_VMEM_BUDGET = 8 * 1024 * 1024
_TB_MAX = 4096


def _round_up(x, m):
    return ((x + m - 1) // m) * m


def prepare_hero_weight(weight):
    """Pre-transpose + zero-pad the PyTorch weight (out_size, HERO_COUNT) once.

    Returns wT_padded: (HERO_COUNT_PAD, OUT_pad) bfloat16 with OUT_pad a multiple
    of 128. Zero padding of the contraction dim is numerically exact (ids < 121
    never hit the padded rows, and those rows are zero anyway).
    """
    out_size, h = weight.shape
    assert h == HERO_COUNT
    out_pad = _round_up(out_size, LANE)
    wt = jnp.zeros((HERO_COUNT_PAD, out_pad), dtype=jnp.bfloat16)
    wt = wt.at[:h, :out_size].set(weight.T.astype(jnp.bfloat16))
    return wt


def _pick_row_tile(b, out_pad, out_itemsize):
    """Largest row tile that fits the double-buffered output budget, capped at 4096."""
    rows = _round_up(max(b, 1), SUBLANE)
    cap = max(SUBLANE, (_OUT_TILE_VMEM_BUDGET // (2 * out_pad * out_itemsize))
              // SUBLANE * SUBLANE)
    tb = min(_TB_MAX, cap, rows)
    # If a large batch would land in a single block, split it so the parallel
    # axis has >= 2 blocks (keeps both v7x TensorCores busy; no-op on v5e/v6e).
    if tb == rows and rows >= 2048:
        tb = _round_up(-(-rows // 2), SUBLANE)
    return tb


def hero_encoder_kernel(ids_ref, wt_ref, o_ref):
    # ids_ref: (1, TB) int32 lane-dense, wt_ref: (HPAD, OUT_pad) bf16,
    # o_ref:   (TB, OUT_pad) bf16
    hpad = wt_ref.shape[0]
    tb = o_ref.shape[0]
    ids = ids_ref[...]                                            # (1, TB)
    rows = jax.lax.broadcasted_iota(jnp.int32, (hpad, tb), 0)     # (HPAD, TB)
    one_hot_t = (rows == ids).astype(wt_ref.dtype)                # transposed one-hot
    # Contract over dim 0 of both operands: (HPAD, TB)^T @ (HPAD, OUT) -> (TB, OUT)
    y = jax.lax.dot_general(
        one_hot_t, wt_ref[...],
        dimension_numbers=(((0,), (0,)), ((), ())),
        preferred_element_type=jnp.float32,
    )
    o_ref[...] = y.astype(o_ref.dtype)


@functools.partial(jax.jit, static_argnames=("out_size",))
def hero_encoder(hero_ids, wt_padded, out_size):
    """hero_ids: (B,) int; wt_padded: (HERO_COUNT_PAD, OUT_pad) from prepare_hero_weight.

    Returns (B, out_size) bfloat16, equal to one_hot(hero_ids) @ bf16(W).T.
    """
    (b,) = hero_ids.shape
    hpad, out_pad = wt_padded.shape
    out_dtype = wt_padded.dtype
    out_itemsize = jnp.dtype(out_dtype).itemsize

    tb = _pick_row_tile(b, out_pad, out_itemsize)
    b_pad = _round_up(b, tb)
    n_blocks = b_pad // tb

    ids = hero_ids.astype(jnp.int32).reshape(1, b)                # lane-dense ids
    if b_pad != b:
        ids = jnp.pad(ids, ((0, 0), (0, b_pad - b)))

    cost = pl.CostEstimate(
        flops=2 * b_pad * hpad * out_pad,
        transcendentals=0,
        bytes_accessed=(b_pad * 4                                  # ids
                        + hpad * out_pad * out_itemsize            # weight
                        + b_pad * out_pad * out_itemsize),         # output
    )

    y = pl.pallas_call(
        hero_encoder_kernel,
        out_shape=jax.ShapeDtypeStruct((b_pad, out_pad), out_dtype),
        grid_spec=pltpu.PrefetchScalarGridSpec(
            num_scalar_prefetch=0,
            grid=(n_blocks,),
            in_specs=[
                pl.BlockSpec((1, tb), lambda i: (0, i)),           # ids, lane-dense
                pl.BlockSpec((hpad, out_pad), lambda i: (0, 0)),   # weight, VMEM-resident
            ],
            out_specs=pl.BlockSpec((tb, out_pad), lambda i: (i, 0)),
        ),
        compiler_params=pltpu.CompilerParams(
            dimension_semantics=("parallel",),   # independent row blocks -> both TCs on v7x
        ),
        cost_estimate=cost,
    )(ids, wt_padded)

    # Only slice when padding actually exists (avoids an extra HBM->HBM copy
    # in the common aligned case).
    if b_pad != b or out_pad != out_size:
        y = y[:b, :out_size]
    return y


if __name__ == "__main__":
    key = jax.random.PRNGKey(0)
    k_w, k_idx = jax.random.split(key)

    B = 8
    OUT = 128  # module default out_size=128 -> lane-dense output, no padding waste

    # Deterministic parameter init (nn.Linear weight shape: (out_size, in_size)).
    weight = (jax.random.normal(k_w, (OUT, HERO_COUNT), dtype=jnp.float32)
              * (1.0 / jnp.sqrt(HERO_COUNT)))

    # Hero ids (the kernel rebuilds the one-hot internally; ~121x less HBM input traffic).
    hero_ids = jax.random.randint(k_idx, (B,), 0, HERO_COUNT, dtype=jnp.int32)

    wt_padded = prepare_hero_weight(weight)          # one-time transpose + pad (bf16)
    y = hero_encoder(hero_ids, wt_padded, OUT)
    jax.block_until_ready(y)

    # Reference: one-hot @ W.T selects columns of W. The kernel uses bf16 weights,
    # and one-hot selection is exact, so the result equals bf16(W) column selection.
    w_bf16 = weight.astype(jnp.bfloat16)
    x_onehot = jax.nn.one_hot(hero_ids, HERO_COUNT, dtype=jnp.float32)
    y_ref = x_onehot @ w_bf16.astype(jnp.float32).T

    assert y.shape == (B, OUT)
    assert y.dtype == jnp.bfloat16
    assert jnp.max(jnp.abs(y.astype(jnp.float32) - y_ref)) < 1e-6

    print("KERNEL_OK")
</pallas_src>

<mosaic_0001>
module attributes {stable_mosaic.version = 11 : i64} {
  func.func @hero_encoder_kernel(%arg0: i32, %arg1: memref<1x8xi32, #tpu.memory_space<vmem>>, %arg2: memref<128x128xbf16, #tpu.memory_space<vmem>>, %arg3: memref<8x128xbf16, #tpu.memory_space<vmem>>) attributes {dimension_semantics = [#tpu.dimension_semantics<parallel>], iteration_bounds = array<i64: 1>, scalar_prefetch = 0 : i64, scratch_operands = 0 : i64, tpu.core_type = #tpu.core_type<tc>, window_params = [{transform_indices = @transform_0, window_bounds = array<i64: 1, 8>}, {pipeline_mode = #tpu.pipeline_mode<synchronous>, transform_indices = @transform_1, window_bounds = array<i64: 128, 128>}, {transform_indices = @transform_2, window_bounds = array<i64: 8, 128>}]} {
    %c0 = arith.constant 0 : index
    %c0_0 = arith.constant 0 : index
    %0 = vector.load %arg1[%c0, %c0_0] : memref<1x8xi32, #tpu.memory_space<vmem>>, vector<1x8xi32>
    %1 = tpu.iota {dimensions = array<i32: 0>} : vector<128x8xi32>
    %2 = vector.broadcast %0 : vector<1x8xi32> to vector<128x8xi32>
    %3 = arith.cmpi eq, %1, %2 : vector<128x8xi32>
    %4 = arith.extui %3 : vector<128x8xi1> to vector<128x8xi32>
    %5 = arith.sitofp %4 : vector<128x8xi32> to vector<128x8xf32>
    %6 = arith.truncf %5 : vector<128x8xf32> to vector<128x8xbf16>
    %c0_1 = arith.constant 0 : index
    %c0_2 = arith.constant 0 : index
    %7 = vector.load %arg2[%c0_1, %c0_2] : memref<128x128xbf16, #tpu.memory_space<vmem>>, vector<128x128xbf16>
    %cst = arith.constant dense<0.000000e+00> : vector<8x128xf32>
    %8 = tpu.matmul %6, %7, %cst {dimension_numbers = #tpu.dot_dimension_numbers<[0], [0], [1], [1], [0, 1, 1, 1], [], []>} : vector<128x8xbf16>, vector<128x128xbf16>, vector<8x128xf32> -> vector<8x128xf32>
    %9 = arith.truncf %8 : vector<8x128xf32> to vector<8x128xbf16>
    %c0_3 = arith.constant 0 : index
    %c0_4 = arith.constant 0 : index
    %10 = vector.load %arg3[%c0_3, %c0_4] : memref<8x128xbf16, #tpu.memory_space<vmem>>, vector<8x128xbf16>
    tpu.vector_store %arg3[%c0_3, %c0_4], %9 {strides = array<i32>} : memref<8x128xbf16, #tpu.memory_space<vmem>>, vector<8x128xbf16>,
    return
  }
  func.func @transform_0(%arg0: i32) -> (i32, i32) {
    %c0_i32 = arith.constant 0 : i32
    %c0_i32_0 = arith.constant 0 : i32
    return %c0_i32, %arg0 : i32, i32
  }
  func.func @transform_1(%arg0: i32) -> (i32, i32) {
    %c0_i32 = arith.constant 0 : i32
    %c0_i32_0 = arith.constant 0 : i32
    %c0_i32_1 = arith.constant 0 : i32
    return %c0_i32, %c0_i32_0 : i32, i32
  }
  func.func @transform_2(%arg0: i32) -> (i32, i32) {
    %c0_i32 = arith.constant 0 : i32
    %c0_i32_0 = arith.constant 0 : i32
    return %arg0, %c0_i32 : i32, i32
  }
}

</mosaic_0001>

<llo_original>
// kernel: hero_encoder.1
$region0: #{hero_encoder.1}
  #allocation0 [shape = 'u32[]', space=smem, size = 0x4, offset = 0x4, fixed_abs, tag = 'smem constant byte address 0x4 - core index']
  #allocation1 [shape = 'u32[144,128]{1,0:T(1,128)}', space=vmem, size = 0x12000, scoped, tag = 'internal scratch']
  %s0 = inlined_call_operand.vmem [shape: s32[1,8], index: 0, kind: input, shape index: {}]
  %s1 = inlined_call_operand.hbm [shape: bf16[128,128], index: 1, kind: input, shape index: {}]
  %s2 = inlined_call_operand.hbm [shape: bf16[8,128], index: 2, kind: output, shape index: {}]
  %s3 = sld [smem:[#allocation0]]
  $region22: #{hero_encoder.1} parent=0
    _
  %s5 = ssub.s32 1, %s3
  %s6 = scalar_select 0, %s5, %s3
  $region1: #{hero_encoder.1} parent=0
    #allocation2 [shape = 'u8[32768]{0}', space=vmem, size = 0x8000, scoped, tag = 'input window, operand 1, single buffered']
    #allocation3 [shape = 's32[1]{0}', space=sflag, size = 0x4, scoped, tag = 'scoped memory for hero_encoder.1']
    #allocation4 [shape = 's32[1]{0}', space=sflag, size = 0x4, scoped, tag = 'scoped memory for hero_encoder.1']
    #allocation5 [shape = 'u8[2048]{0}', space=vmem, size = 0x800, scoped, tag = 'output window, operand 0, single buffered']
    %7 = vsyncpa [#allocation3], 0
    %8 = vsyncpa [#allocation4], 0
    // Predicated region
    $region2: #{hero_encoder.1} parent=1 // pred_check
      _
    $region3: #{hero_encoder.1} parent=1 // pred_check_branch
      %10 = sbr.rel (0) target = $region5
    $region4: #{hero_encoder.1} parent=1 // pred_region
      _
    $region5: #{hero_encoder.1} parent=1 // pred_fallthru
      _
    // Predicated region
    $region6: #{hero_encoder.1} parent=1 // pred_check
      _
    $region7: #{hero_encoder.1} parent=1 // pred_check_branch
      %12 = sbr.rel (0) target = $region9
    $region8: #{hero_encoder.1} parent=1 // pred_region
      %s14 = ssub.s32 1024, 1024
      %15 = vsyncadd [#allocation3], %s14
      %s16 = sshll.u32 [#allocation2], 4
      %s17 = int_to_ptr.vmem [resolvable:$true] %s16
      %22 = dma.hbm_to_vmem [thread:$0]  %s1, 1024, %s17, [#allocation3], 64, 64, 4
    $region9: #{hero_encoder.1} parent=1 // pred_fallthru
      _
    // Predicated region
    $region10: #{hero_encoder.1} parent=1 // pred_check
      _
    $region11: #{hero_encoder.1} parent=1 // pred_check_branch
      %24 = sbr.rel (0) target = $region13
    $region12: #{hero_encoder.1} parent=1 // pred_region
      %25 = dma.done [#allocation3], 1024
    $region13: #{hero_encoder.1} parent=1 // pred_fallthru
      _
    %v27 = vld [vmem:[%s0] sm:$0x1]
    %v28 = vlaneseq
    %v29 = vshrl.u32 %v28, 7
    %v30 = vadd.s32 %v29, 8
    %v31 = vadd.s32 %v29, 16
    %v32 = vadd.s32 %v29, 24
    %v33 = vadd.s32 %v29, 32
    %v34 = vadd.s32 %v29, 40
    %v35 = vadd.s32 %v29, 48
    %v36 = vadd.s32 %v29, 56
    %v37 = vadd.s32 %v29, 64
    %v38 = vadd.s32 %v29, 72
    %v39 = vadd.s32 %v29, 80
    %v40 = vadd.s32 %v29, 88
    %v41 = vadd.s32 %v29, 96
    %v42 = vadd.s32 %v29, 104
    %v43 = vadd.s32 %v29, 112
    %v44 = vadd.s32 %v29, 120
    %v45 = vlaneseq
    %v46 = vshrl.u32 %v45, 7
    %v47 = vsub.s32 0, %v46
    %v48 = vrot.slane %v27, %v47
    %vm49 = vcmp.eq.s32.totalorder %v29, %v48
    %vm50 = vcmp.eq.s32.totalorder %v30, %v48
    %vm51 = vcmp.eq.s32.totalorder %v31, %v48
    %vm52 = vcmp.eq.s32.totalorder %v32, %v48
    %vm53 = vcmp.eq.s32.totalorder %v33, %v48
    %vm54 = vcmp.eq.s32.totalorder %v34, %v48
    %vm55 = vcmp.eq.s32.totalorder %v35, %v48
    %vm56 = vcmp.eq.s32.totalorder %v36, %v48
    %vm57 = vcmp.eq.s32.totalorder %v37, %v48
    %vm58 = vcmp.eq.s32.totalorder %v38, %v48
    %vm59 = vcmp.eq.s32.totalorder %v39, %v48
    %vm60 = vcmp.eq.s32.totalorder %v40, %v48
    %vm61 = vcmp.eq.s32.totalorder %v41, %v48
    %vm62 = vcmp.eq.s32.totalorder %v42, %v48
    %vm63 = vcmp.eq.s32.totalorder %v43, %v48
    %vm64 = vcmp.eq.s32.totalorder %v44, %v48
    %v65 = vsel %vm49, 1, 0
    %v66 = vsel %vm50, 1, 0
    %v67 = vsel %vm51, 1, 0
    %v68 = vsel %vm52, 1, 0
    %v69 = vsel %vm53, 1, 0
    %v70 = vsel %vm54, 1, 0
    %v71 = vsel %vm55, 1, 0
    %v72 = vsel %vm56, 1, 0
    %v73 = vsel %vm57, 1, 0
    %v74 = vsel %vm58, 1, 0
    %v75 = vsel %vm59, 1, 0
    %v76 = vsel %vm60, 1, 0
    %v77 = vsel %vm61, 1, 0
    %v78 = vsel %vm62, 1, 0
    %v79 = vsel %vm63, 1, 0
    %v80 = vsel %vm64, 1, 0
    %v81 = vcvt.s32.f32 %v65
    %v82 = vcvt.s32.f32 %v66
    %v83 = vcvt.s32.f32 %v67
    %v84 = vcvt.s32.f32 %v68
    %v85 = vcvt.s32.f32 %v69
    %v86 = vcvt.s32.f32 %v70
    %v87 = vcvt.s32.f32 %v71
    %v88 = vcvt.s32.f32 %v72
    %v89 = vcvt.s32.f32 %v73
    %v90 = vcvt.s32.f32 %v74
    %v91 = vcvt.s32.f32 %v75
    %v92 = vcvt.s32.f32 %v76
    %v93 = vcvt.s32.f32 %v77
    %v94 = vcvt.s32.f32 %v78
    %v95 = vcvt.s32.f32 %v79
    %v96 = vcvt.s32.f32 %v80
    %v97 = vpack.c.bf16 %v82, %v81
    %v98 = vpack.c.bf16 %v84, %v83
    %v99 = vpack.c.bf16 %v86, %v85
    %v100 = vpack.c.bf16 %v88, %v87
    %v101 = vpack.c.bf16 %v90, %v89
    %v102 = vpack.c.bf16 %v92, %v91
    %v103 = vpack.c.bf16 %v94, %v93
    %v104 = vpack.c.bf16 %v96, %v95
    %v105 = vld [vmem:[#allocation2] sm:$0xf]
    %v106 = vld [vmem:[#allocation2 + $0x4] sm:$0xf]
    %v107 = vld [vmem:[#allocation2 + $0x8] sm:$0xf]
    %v108 = vld [vmem:[#allocation2 + $0xc] sm:$0xf]
    %v109 = vld [vmem:[#allocation2 + $0x10] sm:$0xf]
    %v110 = vld [vmem:[#allocation2 + $0x14] sm:$0xf]
    %v111 = vld [vmem:[#allocation2 + $0x18] sm:$0xf]
    %v112 = vld [vmem:[#allocation2 + $0x1c] sm:$0xf]
    %v113 = vld [vmem:[#allocation2 + $0x20] sm:$0xf]
    %v114 = vld [vmem:[#allocation2 + $0x24] sm:$0xf]
    %v115 = vld [vmem:[#allocation2 + $0x28] sm:$0xf]
    %v116 = vld [vmem:[#allocation2 + $0x2c] sm:$0xf]
    %v117 = vld [vmem:[#allocation2 + $0x30] sm:$0xf]
    %v118 = vld [vmem:[#allocation2 + $0x34] sm:$0xf]
    %v119 = vld [vmem:[#allocation2 + $0x38] sm:$0xf]
    %v120 = vld [vmem:[#allocation2 + $0x3c] sm:$0xf]
    %121 = vxpose.xlu0.c.b16.start [1/8] %v97, 128
    %122 = vxpose.xlu0.c.b16.cont [2/8] %v98, 128
    %123 = vxpose.xlu0.c.b16.cont [3/8] %v99, 128
    %124 = vxpose.xlu0.c.b16.cont [4/8] %v100, 128
    %125 = vxpose.xlu0.c.b16.cont [5/8] %v101, 128
    %126 = vxpose.xlu0.c.b16.cont [6/8] %v102, 128
    %127 = vxpose.xlu0.c.b16.cont [7/8] %v103, 128
    %128 = vxpose.xlu0.c.b16.end [8/8] %v104, 128
    %v129 = vpop.trf.xlu0
    %v130 = vpop.trf.xlu0
    %v131 = vpop.trf.xlu0
    %v132 = vpop.trf.xlu0
    %v133 = vpop.trf.xlu0
    %v134 = vpop.trf.xlu0
    %v135 = vpop.trf.xlu0
    %v136 = vpop.trf.xlu0
    %v153 = vunpack.c.l.b16 %v105
    %v154 = vunpack.c.l.b16 %v106
    %v155 = vunpack.c.l.b16 %v107
    %v156 = vunpack.c.l.b16 %v108
    %v157 = vunpack.c.l.b16 %v109
    %v158 = vunpack.c.l.b16 %v110
    %v159 = vunpack.c.l.b16 %v111
    %v160 = vunpack.c.l.b16 %v112
    %v161 = vunpack.c.l.b16 %v113
    %v162 = vunpack.c.l.b16 %v114
    %v163 = vunpack.c.l.b16 %v115
    %v164 = vunpack.c.l.b16 %v116
    %v165 = vunpack.c.l.b16 %v117
    %v166 = vunpack.c.l.b16 %v118
    %v167 = vunpack.c.l.b16 %v119
    %v168 = vunpack.c.l.b16 %v120
    %v169 = vpack.c.b16 %v154, %v153
    %v170 = vpack.c.b16 %v156, %v155
    %v171 = vpack.c.b16 %v158, %v157
    %v172 = vpack.c.b16 %v160, %v159
    %v173 = vpack.c.b16 %v162, %v161
    %v174 = vpack.c.b16 %v164, %v163
    %v175 = vpack.c.b16 %v166, %v165
    %v176 = vpack.c.b16 %v168, %v167
    %185 = vmatprep.subr.bf16.mxu0 0
    %186 = vmatpush1.bf16.msra.mxu0 %v176
    %187 = vmatprep.subr.bf16.mxu0 0
    %188 = vmatpush1.bf16.msra.mxu0 %v175
    %189 = vmatprep.subr.bf16.mxu0 0
    %190 = vmatpush1.bf16.msra.mxu0 %v174
    %191 = vmatprep.subr.bf16.mxu0 0
    %192 = vmatpush1.bf16.msra.mxu0 %v173
    %193 = vmatprep.subr.bf16.mxu0 0
    %194 = vmatpush1.bf16.msra.mxu0 %v172
    %195 = vmatprep.subr.bf16.mxu0 0
    %196 = vmatpush1.bf16.msra.mxu0 %v171
    %197 = vmatprep.subr.bf16.mxu0 0
    %198 = vmatpush1.bf16.msra.mxu0 %v170
    %199 = vmatprep.subr.bf16.mxu0 0
    %200 = vmatpush1.bf16.msra.mxu0 %v169
    %201 = vmatprep.subr.bf16.mxu0 0
    %202 = vmatpush2.bf16.msra.mxu0 0
    %203 = vmatprep.subr.bf16.mxu0 0
    %204 = vmatpush2.bf16.msra.mxu0 0
    %205 = vmatprep.subr.bf16.mxu0 0
    %206 = vmatpush2.bf16.msra.mxu0 0
    %207 = vmatprep.subr.bf16.mxu0 0
    %208 = vmatpush2.bf16.msra.mxu0 0
    %209 = vmatprep.subr.bf16.mxu0 0
    %210 = vmatpush2.bf16.msra.mxu0 0
    %211 = vmatprep.subr.bf16.mxu0 0
    %212 = vmatpush2.bf16.msra.mxu0 0
    %213 = vmatprep.subr.bf16.mxu0 0
    %214 = vmatpush2.bf16.msra.mxu0 0
    %215 = vmatprep.subr.bf16.mxu0 0
    %216 = vmatpush2.bf16.msra.mxu0 0
    %217 = vmatprep.mubr.bf16.mxu0 0
    %218 = vmatmul.mubr.bf16.gmra.mxu0 %v129
    %v219 = vpop.f32.mrf.mxu0
    %v220 = vadd.f32 0.0, %v219
    %v221 = vpop.f32.mrf.mxu0
    %v222 = vpop.f32.mrf.mxu0
    %v223 = vpop.f32.mrf.mxu0
    %224 = vdwg.mxu0
    %v225 = vpack.c.bf16 %v220, %v220
    %226 = vst [vmem:[#allocation5] sm:$0xf] %v225
    // Predicated region
    $region14: #{hero_encoder.1} parent=1 // pred_check
      _
    $region15: #{hero_encoder.1} parent=1 // pred_check_branch
      %228 = sbr.rel (0) target = $region17
    $region16: #{hero_encoder.1} parent=1 // pred_region
      %s230 = ssub.s32 64, 64
      %231 = vsyncadd [#allocation4], %s230
      %s233 = sshll.u32 [#allocation5], 4
      %s234 = int_to_ptr.vmem [resolvable:$true] %s233
      %236 = dma.vmem_to_hbm [thread:$0]  %s234, 64, %s2, [#allocation4]
    $region17: #{hero_encoder.1} parent=1 // pred_fallthru
      _
    // Predicated region
    $region18: #{hero_encoder.1} parent=1 // pred_check
      _
    $region19: #{hero_encoder.1} parent=1 // pred_check_branch
      %238 = sbr.rel (0) target = $region21
    $region20: #{hero_encoder.1} parent=1 // pred_region
      %239 = dma.done [#allocation4], 64
    $region21: #{hero_encoder.1} parent=1 // pred_fallthru
      _
    %240 = vsyncpa [#allocation3], 1
    %241 = vsyncpa [#allocation4], 1

</llo_original>
